<compile_context>
chip_gen: v7x
topology: tpu7x:2x2x1
jax: 0.10.0
libtpu: 0.0.40
codegen_flags: <defaults>
</compile_context>

<pallas_src>
import functools

import jax
import jax.numpy as jnp
import numpy as np
from jax import lax
from jax.experimental import pallas as pl
from jax.experimental.pallas import tpu as pltpu


_VMEM_CAP = 64 << 20        # v7x physical VMEM per TC; safe ceiling everywhere
_IN_BUDGET = 24 << 20       # target bytes for the double-buffered input block


def _largest_divisor_leq(n, cap):
    cap = max(1, min(n, cap))
    best = 1
    for d in range(1, n + 1):
        if n % d == 0 and d <= cap:
            best = d
    return best


def _pick_batch_tile(B, bytes_per_b, budget):
    """Largest divisor of B (== B or 8-aligned) with tb*bytes_per_b <= budget."""
    cands = [d for d in range(1, B + 1) if B % d == 0 and (d == B or d % 8 == 0)]
    ok = [d for d in cands if d * bytes_per_b <= budget]
    return max(ok) if ok else min(cands)


# ----------------------------------------------------------------------------
# Kernel 1: "naive" aggregation
#   output[b, k] = sum_{l, h, q} att[l, b, h, q, k]
#   output[b, k] = +inf  where att[0, b, 1, 1, k] == 0   (mask passed as input)
# ----------------------------------------------------------------------------
def _naive_agg_kernel(att_ref, mask_ref, out_ref):
    l = pl.program_id(1)
    h = pl.program_id(2)
    q = pl.program_id(3)
    first = (l == 0) & (h == 0) & (q == 0)
    last = ((l == pl.num_programs(1) - 1)
            & (h == pl.num_programs(2) - 1)
            & (q == pl.num_programs(3) - 1))

    # (TB, TH, TQ, S) tile -> (TB, S) partial sum, f32 accumulation.
    # Static per-head loop keeps f32 temporaries at (TB, TQ, S) instead of
    # upcasting the whole head-grouped block at once.
    th = att_ref.shape[1]
    part = att_ref[:, 0].astype(jnp.float32).sum(axis=1)           # (TB, S)
    for t in range(1, th):
        part = part + att_ref[:, t].astype(jnp.float32).sum(axis=1)

    @pl.when(first)
    def _init():
        out_ref[...] = jnp.zeros_like(out_ref)                     # resident block

    out_ref[...] += part

    @pl.when(last)
    def _finalize():
        out_ref[...] = jnp.where(mask_ref[...] == 0, jnp.inf, out_ref[...])


def aggregate_attentions_naive(attentions, *, tb=None, tq=128):
    """attentions: (L, B, H, S, S) float32 or bfloat16 -> (B, S) float32."""
    L, B, H, S, _ = attentions.shape
    tb = B if tb is None else tb
    assert B % tb == 0, "batch tile must divide batch"
    assert tb == B or tb % 8 == 0, "partial batch tiles must be 8-aligned"
    tq = S if S <= tq else tq
    if S % tq:
        tq = S

    # Padding-mask row (same slice the PyTorch code takes: att[0, :, 1, 1, :]).
    mask_row = attentions[0, :, 1, 1, :]                            # (B, S)

    itemsize = jnp.dtype(attentions.dtype).itemsize
    per_head = 2 * tb * tq * S * itemsize        # double-buffered bytes / head
    th = _largest_divisor_leq(H, max(1, _IN_BUDGET // max(per_head, 1)))

    temps = 2 * tb * tq * S * 4                  # f32 per-head partials
    aux = 2 * tb * S * (itemsize + 4)            # mask + output blocks
    vmem_limit = int(min(_VMEM_CAP,
                         max(32 << 20, th * per_head + temps + aux + (4 << 20))))

    return pl.pallas_call(
        _naive_agg_kernel,
        out_shape=jax.ShapeDtypeStruct((B, S), jnp.float32),
        grid_spec=pltpu.PrefetchScalarGridSpec(
            num_scalar_prefetch=0,
            grid=(B // tb, L, H // th, S // tq),
            in_specs=[
                pl.BlockSpec(
                    (pl.Squeezed(), tb, th, tq, S),
                    lambda b, l, h, q: (l, b, h, q, 0),
                ),
                pl.BlockSpec((tb, S), lambda b, l, h, q: (b, 0)),
            ],
            out_specs=pl.BlockSpec((tb, S), lambda b, l, h, q: (b, 0)),
        ),
        compiler_params=pltpu.CompilerParams(
            dimension_semantics=("parallel", "arbitrary", "arbitrary", "arbitrary"),
            vmem_limit_bytes=vmem_limit,
        ),
    )(attentions, mask_row)


# ----------------------------------------------------------------------------
# Kernel 2: "rollout" aggregation (residual attentions + rollout matmul chain)
#   R[l] = row_normalize( mean_h att[l] + I )
#   J[0] = R[0];  J[l] = R[l] @ J[l-1]
#   output[b, k] = sum_{l, q} J[l, b, q, k]   (+inf mask as above)
# ----------------------------------------------------------------------------
def _rollout_agg_kernel(n_heads, att_ref, mask_ref, out_ref, rsum_ref, joint_ref):
    l = pl.program_id(1)
    hb = pl.program_id(2)
    n_layers = pl.num_programs(1)
    last_hb = pl.num_programs(2) - 1

    # (TB, TH, S, S) block -> per-head f32 accumulation into (TB, S, S).
    th = att_ref.shape[1]
    part = att_ref[:, 0].astype(jnp.float32)                        # (TB, S, S)
    for t in range(1, th):
        part = part + att_ref[:, t].astype(jnp.float32)

    @pl.when(hb == 0)
    def _init_layer_sum():
        rsum_ref[...] = part

    @pl.when(hb != 0)
    def _acc_layer_sum():
        rsum_ref[...] += part

    @pl.when(hb == last_hb)
    def _layer_step():
        S = rsum_ref.shape[-1]
        eye = (lax.broadcasted_iota(jnp.int32, (S, S), 0)
               == lax.broadcasted_iota(jnp.int32, (S, S), 1)).astype(jnp.float32)
        resid = rsum_ref[...] * (1.0 / n_heads) + eye[None]         # (TB, S, S)
        resid = resid / resid.sum(axis=-1, keepdims=True)

        @pl.when(l == 0)
        def _first_layer():
            joint_ref[...] = resid
            out_ref[...] = resid.sum(axis=1)

        @pl.when(l != 0)
        def _chain():
            # bf16 MXU operands, f32 accumulation: probabilities in [0,1]
            # tolerate bf16; ~2x MXU throughput vs f32 on all generations.
            joint = jnp.einsum(
                "bij,bjk->bik",
                resid.astype(jnp.bfloat16),
                joint_ref[...].astype(jnp.bfloat16),
                preferred_element_type=jnp.float32)
            joint_ref[...] = joint
            out_ref[...] += joint.sum(axis=1)

        @pl.when(l == n_layers - 1)
        def _finalize():
            out_ref[...] = jnp.where(mask_ref[...] == 0, jnp.inf, out_ref[...])


def aggregate_attentions_rollout(attentions, *, tb=None):
    """attentions: (L, B, H, S, S) float32 or bfloat16 -> (B, S) float32."""
    L, B, H, S, _ = attentions.shape
    itemsize = jnp.dtype(attentions.dtype).itemsize
    if tb is None:
        # Keep the two f32 (tb,S,S) scratches + one double-buffered head block
        # comfortably inside the 64 MiB v7x VMEM.
        tb = _pick_batch_tile(B, (2 * 4 + 2 * itemsize) * S * S, 28 << 20)
    assert B % tb == 0, "batch tile must divide batch"
    assert tb == B or tb % 8 == 0, "partial batch tiles must be 8-aligned"

    mask_row = attentions[0, :, 1, 1, :]                            # (B, S)

    per_head = 2 * tb * S * S * itemsize         # double-buffered bytes / head
    th = _largest_divisor_leq(H, max(1, (20 << 20) // max(per_head, 1)))

    scratch_bytes = 2 * tb * S * S * 4
    temps = 4 * tb * S * S * 4                   # f32 part/resid/joint + casts
    vmem_limit = int(min(_VMEM_CAP,
                         max(32 << 20,
                             th * per_head + scratch_bytes + temps + (4 << 20))))

    kernel = functools.partial(_rollout_agg_kernel, float(H))
    return pl.pallas_call(
        kernel,
        out_shape=jax.ShapeDtypeStruct((B, S), jnp.float32),
        grid_spec=pltpu.PrefetchScalarGridSpec(
            num_scalar_prefetch=0,
            grid=(B // tb, L, H // th),
            in_specs=[
                pl.BlockSpec(
                    (pl.Squeezed(), tb, th, S, S),
                    lambda b, l, h: (l, b, h, 0, 0),
                ),
                pl.BlockSpec((tb, S), lambda b, l, h: (b, 0)),
            ],
            out_specs=pl.BlockSpec((tb, S), lambda b, l, h: (b, 0)),
            scratch_shapes=[
                pltpu.VMEM((tb, S, S), jnp.float32),   # head-mean accumulator
                pltpu.VMEM((tb, S, S), jnp.float32),   # rollout joint matrix
            ],
        ),
        compiler_params=pltpu.CompilerParams(
            dimension_semantics=("parallel", "arbitrary", "arbitrary"),
            vmem_limit_bytes=vmem_limit,
        ),
    )(attentions, mask_row)


# ----------------------------------------------------------------------------
# Plain-JAX glue replicating the rest of forward() (static dropout_rate mode).
# ----------------------------------------------------------------------------
def get_last_of_input_ids(input_ids, num_sent=2):
    Bn, S = input_ids.shape
    return input_ids.reshape(Bn // num_sent, num_sent, S)[:, num_sent - 1]


def drop_lowest_attention_tokens(input_ids, attention_sums, *, n_dropout,
                                 min_tokens, padding_token, num_sent):
    Bp, S = attention_sums.shape
    rows = num_sent * (jnp.arange(Bp) + 1) - 1              # rows to modify
    seqs = input_ids[rows]                                   # (Bp, S)
    n_tokens = jnp.sum(seqs != padding_token, axis=1)        # (Bp,)

    # k tokens with the lowest aggregated attention (topk largest=False)
    min_idx = jnp.argsort(attention_sums, axis=1)[:, :n_dropout]     # (Bp, k)
    drop_mask = jnp.any(
        jnp.arange(S)[None, None, :] == min_idx[:, :, None], axis=1)
    dropped = jnp.where(drop_mask, padding_token, seqs)

    # shift non-padding tokens left, pad right with padding_token
    pad_key = (dropped == padding_token).astype(jnp.int32)
    order = jnp.argsort(pad_key, axis=1, stable=True)
    compacted = jnp.take_along_axis(dropped, order, axis=1)

    apply_row = (n_tokens >= min_tokens)[:, None]            # static mode guard
    new_seqs = jnp.where(apply_row, compacted, seqs)
    return input_ids.at[rows].set(new_seqs)


class AttentionDrivenDropoutPallas:
    """JAX/Pallas port of AttentionDrivenDropout (static dropout_rate mode).

    The pretrained language model is not reproduced; the per-layer attention
    tensors are passed in directly (shape (L, B, H, S, S)).
    """
    # TODO(synk): pretrained BERT/RoBERTa forward (the producer of `attentions`)
    #             has no clean Pallas equivalent; attentions are an input here.
    # TODO(synk): dropout_rate="dynamic" and last_layer_only=True need
    #             data-dependent variable-length slicing; only the defaults
    #             ("static", last_layer_only=False) are implemented.

    def __init__(self, *, n_dropout=1, min_tokens=10, dropout_rate="static",
                 summation_method="naive", padding_token=0):
        if dropout_rate != "static":
            raise NotImplementedError("only static dropout_rate implemented")
        self.n_dropout = n_dropout
        self.min_tokens = min_tokens
        self.padding_token = padding_token
        self.aggregation_func = {
            "naive": aggregate_attentions_naive,
            "rollout": aggregate_attentions_rollout,
        }[summation_method]

    def __call__(self, input_ids, attentions, *, num_sent=2,
                 return_scores=False, training=True):
        if not training:
            return input_ids
        attention_sums = self.aggregation_func(attentions)          # (Bp, S)
        new_ids = drop_lowest_attention_tokens(
            input_ids, attention_sums,
            n_dropout=self.n_dropout, min_tokens=self.min_tokens,
            padding_token=self.padding_token, num_sent=num_sent)
        if return_scores:
            return new_ids, attention_sums
        return new_ids


if __name__ == "__main__":
    key = jax.random.PRNGKey(0)
    k1, k2 = jax.random.split(key)

    num_sent = 2
    B_pairs = 2                 # -> input_ids has B_pairs * num_sent rows
    S = 16                      # seq length
    L = 3                       # layers
    H = 4                       # heads

    # deterministic synthetic input ids with trailing padding (pad token = 0)
    ids = jax.random.randint(k1, (B_pairs * num_sent, S), 1, 1000,
                             dtype=jnp.int32)
    lengths = jnp.array([16, 14, 12, 11], dtype=jnp.int32)
    input_ids = jnp.where(jnp.arange(S)[None, :] < lengths[:, None], ids, 0)

    # deterministic synthetic attentions (softmax over key axis)
    logits = jax.random.normal(k2, (L, B_pairs, H, S, S), dtype=jnp.float32)
    attentions = jax.nn.softmax(logits, axis=-1)

    # --- naive aggregation kernel (f32) + reference check ---
    naive_out = jax.block_until_ready(aggregate_attentions_naive(attentions))
    ref_naive = jnp.sum(attentions, axis=(0, 2, 3))
    ref_naive = jnp.where(attentions[0, :, 1, 1, :] == 0, jnp.inf, ref_naive)
    assert naive_out.shape == (B_pairs, S)
    assert jnp.allclose(naive_out, ref_naive, rtol=1e-5, atol=1e-5)

    # --- naive aggregation kernel (bf16 inputs, halves HBM traffic) ---
    att_bf16 = attentions.astype(jnp.bfloat16)
    naive_bf16 = jax.block_until_ready(aggregate_attentions_naive(att_bf16))
    ref_bf16 = jnp.sum(att_bf16.astype(jnp.float32), axis=(0, 2, 3))
    ref_bf16 = jnp.where(att_bf16[0, :, 1, 1, :].astype(jnp.float32) == 0,
                         jnp.inf, ref_bf16)
    assert jnp.allclose(naive_bf16, ref_bf16, rtol=2e-2, atol=2e-2)

    # --- rollout aggregation kernel + reference check (bf16 MXU -> loose tol) ---
    roll_out = jax.block_until_ready(aggregate_attentions_rollout(attentions))
    eye = jnp.eye(S, dtype=jnp.float32)
    resid = attentions.sum(axis=2) / H + eye[None, None]
    resid = resid / resid.sum(axis=-1, keepdims=True)
    joint = resid[0]
    ref_roll = joint.sum(axis=1)
    for i in range(1, L):
        joint = jnp.einsum("bij,bjk->bik", resid[i], joint)
        ref_roll = ref_roll + joint.sum(axis=1)
    ref_roll = jnp.where(attentions[0, :, 1, 1, :] == 0, jnp.inf, ref_roll)
    assert roll_out.shape == (B_pairs, S)
    assert jnp.allclose(roll_out, ref_roll, rtol=2e-2, atol=1e-2)

    # --- full forward (default config: static, naive, n_dropout=1) ---
    add = AttentionDrivenDropoutPallas(n_dropout=1, min_tokens=10,
                                       dropout_rate="static",
                                       summation_method="naive",
                                       padding_token=0)
    new_input_ids, scores = add(input_ids, attentions, num_sent=num_sent,
                                return_scores=True, training=True)
    new_input_ids = jax.block_until_ready(new_input_ids)
    assert new_input_ids.shape == input_ids.shape
    assert new_input_ids.dtype == input_ids.dtype

    # numpy emulation of the PyTorch token-removal loop (static mode)
    def _ref_drop(ids_np, scores_np, n_dropout, min_tokens, pad, nsent):
        ids_np = ids_np.copy()
        Bp, S_ = scores_np.shape
        for i in range(Bp):
            row = nsent * (i + 1) - 1
            seq = ids_np[row].copy()
            if int((seq != pad).sum()) < min_tokens:
                continue
            ind = np.argsort(scores_np[i], kind="stable")[:n_dropout]
            seq[ind] = pad
            toks = seq[seq != pad]
            out = np.full(S_, pad, dtype=seq.dtype)
            out[:len(toks)] = toks
            ids_np[row] = out
        return ids_np

    ref_ids = _ref_drop(np.asarray(input_ids), np.asarray(scores),
                        1, 10, 0, num_sent)
    assert np.array_equal(np.asarray(new_input_ids), ref_ids)

    print("KERNEL_OK")
</pallas_src>

<mosaic_0001>
module attributes {stable_mosaic.version = 11 : i64} {
  func.func @_naive_agg_kernel(%arg0: i32, %arg1: i32, %arg2: i32, %arg3: i32, %arg4: memref<1x2x4x16x16xf32, #tpu.memory_space<vmem>>, %arg5: memref<2x16xf32, #tpu.memory_space<vmem>>, %arg6: memref<2x16xf32, #tpu.memory_space<vmem>>) attributes {dimension_semantics = [#tpu.dimension_semantics<parallel>, #tpu.dimension_semantics<arbitrary>, #tpu.dimension_semantics<arbitrary>, #tpu.dimension_semantics<arbitrary>], iteration_bounds = array<i64: 1, 3, 1, 1>, scalar_prefetch = 0 : i64, scratch_operands = 0 : i64, tpu.core_type = #tpu.core_type<tc>, window_params = [{transform_indices = @transform_0, window_bounds = array<i64: 1, 2, 4, 16, 16>}, {transform_indices = @transform_1, window_bounds = array<i64: 2, 16>}, {transform_indices = @transform_2, window_bounds = array<i64: 2, 16>}]} {
    %c0_i32 = arith.constant 0 : i32
    %0 = arith.cmpi eq, %arg1, %c0_i32 : i32
    %c0_i32_0 = arith.constant 0 : i32
    %1 = arith.cmpi eq, %arg2, %c0_i32_0 : i32
    %2 = arith.andi %0, %1 : i1
    %c0_i32_1 = arith.constant 0 : i32
    %3 = arith.cmpi eq, %arg3, %c0_i32_1 : i32
    %4 = arith.andi %2, %3 : i1
    %c2_i32 = arith.constant 2 : i32
    %5 = arith.cmpi eq, %arg1, %c2_i32 : i32
    %c0_i32_2 = arith.constant 0 : i32
    %6 = arith.cmpi eq, %arg2, %c0_i32_2 : i32
    %7 = arith.andi %5, %6 : i1
    %c0_i32_3 = arith.constant 0 : i32
    %8 = arith.cmpi eq, %arg3, %c0_i32_3 : i32
    %9 = arith.andi %7, %8 : i1
    %c0 = arith.constant 0 : index
    %c0_4 = arith.constant 0 : index
    %c0_5 = arith.constant 0 : index
    %c0_6 = arith.constant 0 : index
    %c0_7 = arith.constant 0 : index
    %10 = vector.load %arg4[%c0, %c0_4, %c0_5, %c0_6, %c0_7] : memref<1x2x4x16x16xf32, #tpu.memory_space<vmem>>, vector<1x2x1x16x16xf32>
    %11 = vector.shape_cast %10 : vector<1x2x1x16x16xf32> to vector<2x16x16xf32>
    %cst = arith.constant dense<0.000000e+00> : vector<2x16xf32>
    %12 = vector.multi_reduction <add>, %11, %cst [1] : vector<2x16x16xf32> to vector<2x16xf32>
    %c0_8 = arith.constant 0 : index
    %c0_9 = arith.constant 0 : index
    %c1 = arith.constant 1 : index
    %c0_10 = arith.constant 0 : index
    %c0_11 = arith.constant 0 : index
    %13 = vector.load %arg4[%c0_8, %c0_9, %c1, %c0_10, %c0_11] : memref<1x2x4x16x16xf32, #tpu.memory_space<vmem>>, vector<1x2x1x16x16xf32>
    %14 = vector.shape_cast %13 : vector<1x2x1x16x16xf32> to vector<2x16x16xf32>
    %cst_12 = arith.constant dense<0.000000e+00> : vector<2x16xf32>
    %15 = vector.multi_reduction <add>, %14, %cst_12 [1] : vector<2x16x16xf32> to vector<2x16xf32>
    %16 = arith.addf %12, %15 : vector<2x16xf32>
    %c0_13 = arith.constant 0 : index
    %c0_14 = arith.constant 0 : index
    %c2 = arith.constant 2 : index
    %c0_15 = arith.constant 0 : index
    %c0_16 = arith.constant 0 : index
    %17 = vector.load %arg4[%c0_13, %c0_14, %c2, %c0_15, %c0_16] : memref<1x2x4x16x16xf32, #tpu.memory_space<vmem>>, vector<1x2x1x16x16xf32>
    %18 = vector.shape_cast %17 : vector<1x2x1x16x16xf32> to vector<2x16x16xf32>
    %cst_17 = arith.constant dense<0.000000e+00> : vector<2x16xf32>
    %19 = vector.multi_reduction <add>, %18, %cst_17 [1] : vector<2x16x16xf32> to vector<2x16xf32>
    %20 = arith.addf %16, %19 : vector<2x16xf32>
    %c0_18 = arith.constant 0 : index
    %c0_19 = arith.constant 0 : index
    %c3 = arith.constant 3 : index
    %c0_20 = arith.constant 0 : index
    %c0_21 = arith.constant 0 : index
    %21 = vector.load %arg4[%c0_18, %c0_19, %c3, %c0_20, %c0_21] : memref<1x2x4x16x16xf32, #tpu.memory_space<vmem>>, vector<1x2x1x16x16xf32>
    %22 = vector.shape_cast %21 : vector<1x2x1x16x16xf32> to vector<2x16x16xf32>
    %cst_22 = arith.constant dense<0.000000e+00> : vector<2x16xf32>
    %23 = vector.multi_reduction <add>, %22, %cst_22 [1] : vector<2x16x16xf32> to vector<2x16xf32>
    %24 = arith.addf %20, %23 : vector<2x16xf32>
    %25 = arith.extui %4 : i1 to i32
    %c0_i32_23 = arith.constant 0 : i32
    %26 = arith.cmpi ne, %25, %c0_i32_23 : i32
    scf.if %26 {
      %cst_29 = arith.constant 0.000000e+00 : f32
      %32 = vector.broadcast %cst_29 : f32 to vector<2x16xf32>
      %c0_30 = arith.constant 0 : index
      %c0_31 = arith.constant 0 : index
      %33 = vector.load %arg6[%c0_30, %c0_31] : memref<2x16xf32, #tpu.memory_space<vmem>>, vector<2x16xf32>
      tpu.vector_store %arg6[%c0_30, %c0_31], %32 {strides = array<i32>} : memref<2x16xf32, #tpu.memory_space<vmem>>, vector<2x16xf32>,
    } else {
    }
    %c0_24 = arith.constant 0 : index
    %c0_25 = arith.constant 0 : index
    %27 = vector.load %arg6[%c0_24, %c0_25] : memref<2x16xf32, #tpu.memory_space<vmem>>, vector<2x16xf32>
    %28 = arith.addf %27, %24 : vector<2x16xf32>
    %c0_26 = arith.constant 0 : index
    %c0_27 = arith.constant 0 : index
    %29 = vector.load %arg6[%c0_26, %c0_27] : memref<2x16xf32, #tpu.memory_space<vmem>>, vector<2x16xf32>
    tpu.vector_store %arg6[%c0_26, %c0_27], %28 {strides = array<i32>} : memref<2x16xf32, #tpu.memory_space<vmem>>, vector<2x16xf32>,
    %30 = arith.extui %9 : i1 to i32
    %c0_i32_28 = arith.constant 0 : i32
    %31 = arith.cmpi ne, %30, %c0_i32_28 : i32
    scf.if %31 {
      %c0_29 = arith.constant 0 : index
      %c0_30 = arith.constant 0 : index
      %32 = vector.load %arg5[%c0_29, %c0_30] : memref<2x16xf32, #tpu.memory_space<vmem>>, vector<2x16xf32>
      %cst_31 = arith.constant 0.000000e+00 : f32
      %33 = vector.broadcast %cst_31 : f32 to vector<2x16xf32>
      %34 = arith.cmpf oeq, %32, %33 : vector<2x16xf32>
      %c0_32 = arith.constant 0 : index
      %c0_33 = arith.constant 0 : index
      %35 = vector.load %arg6[%c0_32, %c0_33] : memref<2x16xf32, #tpu.memory_space<vmem>>, vector<2x16xf32>
      %cst_34 = arith.constant 0x7F800000 : f32
      %36 = vector.broadcast %cst_34 : f32 to vector<2x16xf32>
      %37 = arith.select %34, %36, %35 : vector<2x16xi1>, vector<2x16xf32>
      %c0_35 = arith.constant 0 : index
      %c0_36 = arith.constant 0 : index
      %38 = vector.load %arg6[%c0_35, %c0_36] : memref<2x16xf32, #tpu.memory_space<vmem>>, vector<2x16xf32>
      tpu.vector_store %arg6[%c0_35, %c0_36], %37 {strides = array<i32>} : memref<2x16xf32, #tpu.memory_space<vmem>>, vector<2x16xf32>,
    } else {
    }
    return
  }
  func.func @transform_0(%arg0: i32, %arg1: i32, %arg2: i32, %arg3: i32) -> (i32, i32, i32, i32, i32) {
    %c0_i32 = arith.constant 0 : i32
    %c0_i32_0 = arith.constant 0 : i32
    return %arg1, %arg0, %arg2, %arg3, %c0_i32 : i32, i32, i32, i32, i32
  }
  func.func @transform_1(%arg0: i32, %arg1: i32, %arg2: i32, %arg3: i32) -> (i32, i32) {
    %c0_i32 = arith.constant 0 : i32
    %c0_i32_0 = arith.constant 0 : i32
    return %arg0, %c0_i32 : i32, i32
  }
  func.func @transform_2(%arg0: i32, %arg1: i32, %arg2: i32, %arg3: i32) -> (i32, i32) {
    %c0_i32 = arith.constant 0 : i32
    %c0_i32_0 = arith.constant 0 : i32
    return %arg0, %c0_i32 : i32, i32
  }
}

</mosaic_0001>

<llo_original>
// kernel: tpu_custom_call.1
$region0: #{tpu_custom_call.1}
  #allocation0 [shape = 'u32[]', space=smem, size = 0x4, offset = 0x4, fixed_abs, tag = 'smem constant byte address 0x4 - core index']
  #allocation1 [shape = 'u32[144,128]{1,0:T(1,128)}', space=vmem, size = 0x12000, scoped, tag = 'internal scratch']
  %s0 = inlined_call_operand.hbm [shape: f32[3,2,4,16,16], index: 0, kind: input, shape index: {}]
  %s1 = inlined_call_operand.vmem [shape: f32[2,16], index: 1, kind: input, shape index: {}]
  %s2 = inlined_call_operand.hbm [shape: f32[2,16], index: 2, kind: output, shape index: {}]
  %s3 = sld [smem:[#allocation0]]
  $region53: #{tpu_custom_call.1} parent=0
    _
  %s5 = ssub.s32 1, %s3
  %s6 = scalar_select 0, %s5, %s3
  $region1: #{tpu_custom_call.1} parent=0
    #allocation2 [shape = 'u8[131072]{0}', space=vmem, size = 0x20000, scoped, tag = 'input window, operand 0']
    #allocation3 [shape = 's32[2]{0}', space=sflag, size = 0x8, scoped, tag = 'scoped memory for tpu_custom_call.1']
    #allocation4 [shape = 's32[2]{0}', space=sflag, size = 0x8, scoped, tag = 'scoped memory for tpu_custom_call.1']
    #allocation5 [shape = 'u8[1024]{0}', space=vmem, size = 0x400, scoped, tag = 'output window, operand 0, single buffered']
    %7 = vsyncpa [#allocation3], 0
    %s8 = scalar_lea.sflag [#allocation3], 1
    %9 = vsyncpa %s8, 0
    %10 = vsyncpa [#allocation4], 0
    loop: start=0, step=1, limit=5
    $region2: #{tpu_custom_call.1} parent=1 // loop_pre_header
      _
    $region3: #{tpu_custom_call.1} parent=1 // loop_header
      %s12 = sphi 0, %s16
      %p13 = scmp.ge.s32.totalorder %s12, 5
      %s19 = sphi 0, %s45
      %s20 = sphi 0, %s41
      %s21 = sphi 0, %s37
      %s22 = sphi 0, %s33
      %s23 = sphi 0, %s19
      %s24 = sphi 0, %s20
      %s25 = sphi 0, %s21
      %s26 = sphi 0, %s22
      %s27 = sphi 0, %s23
      %s28 = sphi 0, %s24
      %s29 = sphi 0, %s25
      %s30 = sphi 0, %s26
      %s54 = sphi 0, %s56
      %s57 = sphi 0, %s54
      %s58 = sphi 0, %s57
      %s74 = sphi 0, %s58
      %s80 = sphi 0, %s82
      %s83 = sphi 0, %s80
      %s84 = sphi 0, %s83
      %s100 = sphi 0, %s84
      %s106 = sphi 0, %s108
      %s109 = sphi 0, %s106
      %s110 = sphi 0, %s109
      %s126 = sphi 0, %s110
    $region4: #{tpu_custom_call.1} parent=1 // loop_header_branch
      %15 = sbr.rel (%p13) target = $region8
    $region5: #{tpu_custom_call.1} parent=1 // loop_body
      %s17 = ssub.s32 %s12, 1
      %s18 = ssub.s32 %s12, 2
      %s31 = sadd.s32 1, %s22
      %p32 = scmp.ge.s32.totalorder %s31, 1
      %s33 = scalar_select %p32, 0, %s31
      %s34 = sadd.s32 1, %s21
      %s35 = scalar_select %p32, %s34, %s21
      %p36 = scmp.ge.s32.totalorder %s35, 1
      %s37 = scalar_select %p36, 0, %s35
      %s38 = sadd.s32 1, %s20
      %s39 = scalar_select %p36, %s38, %s20
      %p40 = scmp.ge.s32.totalorder %s39, 3
      %s41 = scalar_select %p40, 0, %s39
      %s42 = sadd.s32 1, %s19
      %s43 = scalar_select %p40, %s42, %s19
      %p44 = scmp.ge.s32.totalorder %s43, 1
      %s45 = scalar_select %p44, 0, %s43
      %s46 = ssub.s32 %s20, %s41
      %s47 = ssub.s32 %s19, %s45
      %s48 = sor.u32 %s46, %s47
      %s49 = ssub.s32 %s21, %s37
      %s50 = sor.u32 %s48, %s49
      %s51 = ssub.s32 %s22, %s33
      %s52 = sor.u32 %s50, %s51
      %p53 = scmp.eq.s32.totalorder %s52, 0
      %s55 = sadd.s32 %s54, 1
      %s56 = scalar_select %p53, %s54, %s55
      %p59 = pneg %p53
      %p60 = scmp.eq.s32.totalorder %s12, 2
      %p61 = por %p59, %p60
      %p62 = scmp.ne.s32.totalorder %s54, %s57
      %p63 = scmp.eq.s32.totalorder %s12, 0
      %p64 = por %p62, %p63
      %p65 = scmp.ne.s32.totalorder %s54, %s57
      %p66 = scmp.eq.s32.totalorder %s17, 2
      %p67 = por %p65, %p66
      %p68 = scmp.ne.s32.totalorder %s57, %s58
      %p69 = scmp.eq.s32.totalorder %s17, 0
      %p70 = por %p68, %p69
      %p71 = scmp.ne.s32.totalorder %s57, %s58
      %p72 = scmp.eq.s32.totalorder %s18, 2
      %p73 = por %p71, %p72
      %p75 = scmp.ne.s32.totalorder %s58, %s74
      %p76 = scmp.eq.s32.totalorder %s18, 0
      %p77 = por %p75, %p76
      %s78 = ssub.s32 %s19, %s45
      %p79 = scmp.eq.s32.totalorder %s78, 0
      %s81 = sadd.s32 %s80, 1
      %s82 = scalar_select %p79, %s80, %s81
      %p85 = pneg %p79
      %p86 = scmp.eq.s32.totalorder %s12, 2
      %p87 = por %p85, %p86
      %p88 = scmp.ne.s32.totalorder %s80, %s83
      %p89 = scmp.eq.s32.totalorder %s12, 0
      %p90 = por %p88, %p89
      %p91 = scmp.ne.s32.totalorder %s80, %s83
      %p92 = scmp.eq.s32.totalorder %s17, 2
      %p93 = por %p91, %p92
      %p94 = scmp.ne.s32.totalorder %s83, %s84
      %p95 = scmp.eq.s32.totalorder %s17, 0
      %p96 = por %p94, %p95
      %p97 = scmp.ne.s32.totalorder %s83, %s84
      %p98 = scmp.eq.s32.totalorder %s18, 2
      %p99 = por %p97, %p98
      %p101 = scmp.ne.s32.totalorder %s84, %s100
      %p102 = scmp.eq.s32.totalorder %s18, 0
      %p103 = por %p101, %p102
      %s104 = ssub.s32 %s19, %s45
      %p105 = scmp.eq.s32.totalorder %s104, 0
      %s107 = sadd.s32 %s106, 1
      %s108 = scalar_select %p105, %s106, %s107
      %p111 = pneg %p105
      %p112 = scmp.eq.s32.totalorder %s12, 2
      %p113 = por %p111, %p112
      %p114 = scmp.ne.s32.totalorder %s106, %s109
      %p115 = scmp.eq.s32.totalorder %s12, 0
      %p116 = por %p114, %p115
      %p117 = scmp.ne.s32.totalorder %s106, %s109
      %p118 = scmp.eq.s32.totalorder %s17, 2
      %p119 = por %p117, %p118
      %p120 = scmp.ne.s32.totalorder %s109, %s110
      %p121 = scmp.eq.s32.totalorder %s17, 0
      %p122 = por %p120, %p121
      %p123 = scmp.ne.s32.totalorder %s109, %s110
      %p124 = scmp.eq.s32.totalorder %s18, 2
      %p125 = por %p123, %p124
      %p127 = scmp.ne.s32.totalorder %s110, %s126
      %p128 = scmp.eq.s32.totalorder %s18, 0
      %p129 = por %p127, %p128
      %p130 = scmp.le.s32.totalorder 1, %s12
      %p131 = scmp.lt.s32.totalorder %s12, 4
      %p132 = pnand %p130, %p131
      %p133 = pneg %p132
      // Predicated region
      $region9: #{tpu_custom_call.1} parent=5 // pred_check
        _
      $region10: #{tpu_custom_call.1} parent=5 // pred_check_branch
        %135 = sbr.rel (%p132) target = $region12
      $region11: #{tpu_custom_call.1} parent=5 // pred_region
        %s136 = ssub.s32 %s12, 1
        // Predicated region
        $region13: #{tpu_custom_call.1} parent=11 // pred_check
          %p137 = pneg %p96
        $region14: #{tpu_custom_call.1} parent=11 // pred_check_branch
          %139 = sbr.rel (%p137) target = $region16
        $region15: #{tpu_custom_call.1} parent=11 // pred_region
          %p140 = scmp.lt.s32.totalorder %s23, 0
          %s141 = scalar_select %p140, %s23, 0
          %s142 = smul.addr %s141, 2
          %s143 = scalar_lea.vmem %s1, %s142
        $region16: #{tpu_custom_call.1} parent=11 // pred_fallthru
          _
      $region12: #{tpu_custom_call.1} parent=5 // pred_fallthru
        _
      %p144 = scmp.lt.s32.totalorder %s12, 3
      // Predicated region
      $region17: #{tpu_custom_call.1} parent=5 // pred_check
        %p145 = pneg %p144
      $region18: #{tpu_custom_call.1} parent=5 // pred_check_branch
        %147 = sbr.rel (%p145) target = $region20
      $region19: #{tpu_custom_call.1} parent=5 // pred_region
        // Predicated region
        $region21: #{tpu_custom_call.1} parent=19 // pred_check
          %p148 = pneg %p64
        $region22: #{tpu_custom_call.1} parent=19 // pred_check_branch
          %150 = sbr.rel (%p148) target = $region24
        $region23: #{tpu_custom_call.1} parent=19 // pred_region
          %s151 = sand.u32 %s54, 1
          %s152 = scalar_lea.sflag [#allocation3], %s151
          %s153 = sand.u32 %s54, 1
          %s154 = smul.addr %s153, 128
          %s155 = scalar_lea.vmem [#allocation2], %s154
          %s156 = smul.u32 2, %s19
          %s157 = smul.u32 4, %s21
          %s158 = smul.u32 2, %s22
          %s160 = ssub.s32 2048, 2048
          %161 = vsyncadd %s152, %s160
          %s162 = smul.addr %s157, 2
          %s163 = sadd.s32 %s158, %s162
          %s164 = smul.addr %s156, 8
          %s165 = sadd.s32 %s163, %s164
          %s166 = smul.addr %s20, 16
          %s167 = sadd.s32 %s165, %s166
          %s168 = smul.addr %s167, 128
          %s169 = scalar_lea.hbm %s0, %s168
          %s170 = sshll.u32 %s155, 4
          %s171 = int_to_ptr.vmem [resolvable:$true] %s170
          %176 = dma.hbm_to_vmem [thread:$0]  %s169, 2048, %s171, %s152, 128, 128, 8
        $region24: #{tpu_custom_call.1} parent=19 // pred_fallthru
          _
      $region20: #{tpu_custom_call.1} parent=5 // pred_fallthru
        _
      %p177 = scmp.le.s32.totalorder 1, %s12
      %p178 = scmp.lt.s32.totalorder %s12, 4
      %p179 = pnand %p177, %p178
      %p180 = pneg %p179
      // Predicated region
      $region25: #{tpu_custom_call.1} parent=5 // pred_check
        _
      $region26: #{tpu_custom_call.1} parent=5 // pred_check_branch
        %182 = sbr.rel (%p179) target = $region28
      $region27: #{tpu_custom_call.1} parent=5 // pred_region
        %s183 = ssub.s32 %s12, 1
        %s184 = sand.u32 %s57, 1
        %s185 = scalar_lea.sflag [#allocation3], %s184
        %s186 = sand.u32 %s57, 1
        %s187 = smul.addr %s186, 128
        %s188 = scalar_lea.vmem [#allocation2], %s187
        // Predicated region
        $region29: #{tpu_custom_call.1} parent=27 // pred_check
          %p189 = pneg %p70
        $region30: #{tpu_custom_call.1} parent=27 // pred_check_branch
          %191 = sbr.rel (%p189) target = $region32
        $region31: #{tpu_custom_call.1} parent=27 // pred_region
          %192 = dma.done %s185, 2048
        $region32: #{tpu_custom_call.1} parent=27 // pred_fallthru
          _
        %s193 = sand.u32 %s57, 1
        %s194 = scalar_lea.sflag [#allocation3], %s193
        %s195 = sand.u32 %s57, 1
        %s196 = smul.addr %s195, 128
        %s197 = scalar_lea.vmem [#allocation2], %s196
        %p198 = pneg %p70
        %p199 = pneg %p67
        %p200 = scmp.lt.s32.totalorder %s23, 0
        %s201 = scalar_select %p200, %s23, 0
        %s202 = smul.addr %s201, 2
        %s203 = scalar_lea.vmem %s1, %s202
        %p204 = pneg %p96
        %p205 = pneg %p93
        %p206 = pneg %p122
        %p207 = pneg %p119
        %s208 = smul.u32 2, %s23
        %s209 = smul.u32 4, %s25
        %s210 = smul.u32 2, %s26
        %p211 = scmp.lt.s32.totalorder %s23, 0
        %s212 = scalar_select %p211, %s23, 0
        %s213 = smul.addr %s212, 2
        %s214 = scalar_lea.vmem %s1, %s213
        %p215 = scmp.eq.s32.totalorder %s24, 0
        %p216 = scmp.eq.s32.totalorder %s25, 0
        %p217 = pnand %p215, %p216
        %p218 = pneg %p217
        %p219 = scmp.eq.s32.totalorder %s26, 0
        %p220 = pnand %p218, %p219
        %p221 = pneg %p220
        %p222 = scmp.eq.s32.totalorder %s24, 2
        %p223 = pnand %p222, %p216
        %p224 = pneg %p223
        %p225 = pnand %p224, %p219
        %p226 = pneg %p225
        %v227 = vld [vmem:[%s188] sm:$0xff]
        %v228 = vld [vmem:[%s188 + $0x8] sm:$0xff]
        %v229 = vld [vmem:[%s188 + $0x40] sm:$0xff]
        %v230 = vld [vmem:[%s188 + $0x48] sm:$0xff]
        %vm231 = vcmask 130048
        %v232 = vsel %vm231, %v227, 0.0
        %v233 = vsel %vm231, %v228, 0.0
        %v234 = vadd.f32 %v232, %v233
        %v235 = vrot.slane %v234, 4
        %v236 = vadd.f32 %v234, %v235
        %v237 = vrot.slane %v236, 2
        %v238 = vadd.f32 %v236, %v237
        %v239 = vrot.slane %v238, 1
        %v240 = vadd.f32 %v238, %v239
        %v241 = vsel %vm231, %v229, 0.0
        %v242 = vsel %vm231, %v230, 0.0
        %v243 = vadd.f32 %v241, %v242
        %v244 = vrot.slane %v243, 4
        %v245 = vadd.f32 %v243, %v244
        %v246 = vrot.slane %v245, 2
        %v247 = vadd.f32 %v245, %v246
        %v248 = vrot.slane %v247, 1
        %v249 = vadd.f32 %v247, %v248
        %s250 = scalar_lea.vmem %s188, 16 [#allocation2]
        %v251 = vld [vmem:[%s250] sm:$0xff]
        %v252 = vld [vmem:[%s250 + $0x8] sm:$0xff]
        %v253 = vld [vmem:[%s250 + $0x40] sm:$0xff]
        %v254 = vld [vmem:[%s250 + $0x48] sm:$0xff]
        %v255 = vsel %vm231, %v251, 0.0
        %v256 = vsel %vm231, %v252, 0.0
        %v257 = vadd.f32 %v255, %v256
        %v258 = vrot.slane %v257, 4
        %v259 = vadd.f32 %v257, %v258
        %v260 = vrot.slane %v259, 2
        %v261 = vadd.f32 %v259, %v260
        %v262 = vrot.slane %v261, 1
        %v263 = vadd.f32 %v261, %v262
        %v264 = vsel %vm231, %v253, 0.0
        %v265 = vsel %vm231, %v254, 0.0
        %v266 = vadd.f32 %v264, %v265
        %v267 = vrot.slane %v266, 4
        %v268 = vadd.f32 %v266, %v267
        %v269 = vrot.slane %v268, 2
        %v270 = vadd.f32 %v268, %v269
        %v271 = vrot.slane %v270, 1
        %v272 = vadd.f32 %v270, %v271
        %v273 = vadd.f32 %v240, %v263
        %v274 = vadd.f32 %v249, %v272
        %s275 = scalar_lea.vmem %s188, 32 [#allocation2]
        %v276 = vld [vmem:[%s275] sm:$0xff]
        %v277 = vld [vmem:[%s275 + $0x8] sm:$0xff]
        %v278 = vld [vmem:[%s275 + $0x40] sm:$0xff]
        %v279 = vld [vmem:[%s275 + $0x48] sm:$0xff]
        %v280 = vsel %vm231, %v276, 0.0
        %v281 = vsel %vm231, %v277, 0.0
        %v282 = vadd.f32 %v280, %v281
        %v283 = vrot.slane %v282, 4
        %v284 = vadd.f32 %v282, %v283
        %v285 = vrot.slane %v284, 2
        %v286 = vadd.f32 %v284, %v285
        %v287 = vrot.slane %v286, 1
        %v288 = vadd.f32 %v286, %v287
        %v289 = vsel %vm231, %v278, 0.0
        %v290 = vsel %vm231, %v279, 0.0
        %v291 = vadd.f32 %v289, %v290
        %v292 = vrot.slane %v291, 4
        %v293 = vadd.f32 %v291, %v292
        %v294 = vrot.slane %v293, 2
        %v295 = vadd.f32 %v293, %v294
        %v296 = vrot.slane %v295, 1
        %v297 = vadd.f32 %v295, %v296
        %v298 = vadd.f32 %v273, %v288
        %v299 = vadd.f32 %v274, %v297
        %s300 = scalar_lea.vmem %s188, 48 [#allocation2]
        %v301 = vld [vmem:[%s300] sm:$0xff]
        %v302 = vld [vmem:[%s300 + $0x8] sm:$0xff]
        %v303 = vld [vmem:[%s300 + $0x40] sm:$0xff]
        %v304 = vld [vmem:[%s300 + $0x48] sm:$0xff]
        %v305 = vsel %vm231, %v301, 0.0
        %v306 = vsel %vm231, %v302, 0.0
        %v307 = vadd.f32 %v305, %v306
        %v308 = vrot.slane %v307, 4
        %v309 = vadd.f32 %v307, %v308
        %v310 = vrot.slane %v309, 2
        %v311 = vadd.f32 %v309, %v310
        %v312 = vrot.slane %v311, 1
        %v313 = vadd.f32 %v311, %v312
        %v314 = vsel %vm231, %v303, 0.0
        %v315 = vsel %vm231, %v304, 0.0
        %v316 = vadd.f32 %v314, %v315
        %v317 = vrot.slane %v316, 4
        %v318 = vadd.f32 %v316, %v317
        %v319 = vrot.slane %v318, 2
        %v320 = vadd.f32 %v318, %v319
        %v321 = vrot.slane %v320, 1
        %v322 = vadd.f32 %v320, %v321
        %v323 = vadd.f32 %v298, %v313
        %v324 = vadd.f32 %v299, %v322
        // Predicated region
        $region33: #{tpu_custom_call.1} parent=27 // pred_check
          _
        $region34: #{tpu_custom_call.1} parent=27 // pred_check_branch
          %326 = sbr.rel (%p220) target = $region36
        $region35: #{tpu_custom_call.1} parent=27 // pred_region
          %vm327 = vcmask 123904
          %328 = vst.msk [vmem:[#allocation5] sm:$0x3] %vm327, 0.0
        $region36: #{tpu_custom_call.1} parent=27 // pred_fallthru
          _
        %v329 = vld [vmem:[#allocation5] sm:$0x3]
        %vm332 = vcmask 1041409
        %v333 = vsel %vm332, %v324, %v323
        %v335 = vadd.f32 %v329, %v333
        %vm336 = vcmask 123904
        %337 = vst.msk [vmem:[#allocation5] sm:$0x3] %vm336, %v335
        // Predicated region
        $region37: #{tpu_custom_call.1} parent=27 // pred_check
          _
        $region38: #{tpu_custom_call.1} parent=27 // pred_check_branch
          %339 = sbr.rel (%p225) target = $region40
        $region39: #{tpu_custom_call.1} parent=27 // pred_region
          %v340 = vld [vmem:[%s214] sm:$0x3]
          %vm341 = vcmp.eq.f32.partialorder %v340, 0.0
          %v342 = vld [vmem:[#allocation5] sm:$0x3]
          %v343 = vsel %vm341, inf, %v342
          %344 = vst.msk [vmem:[#allocation5] sm:$0x3] %vm336, %v343
        $region40: #{tpu_custom_call.1} parent=27 // pred_fallthru
          _
        // Predicated region
        $region41: #{tpu_custom_call.1} parent=27 // pred_check
          %p345 = pneg %p119
        $region42: #{tpu_custom_call.1} parent=27 // pred_check_branch
          %347 = sbr.rel (%p345) target = $region44
        $region43: #{tpu_custom_call.1} parent=27 // pred_region
          %s349 = ssub.s32 32, 32
          %350 = vsyncadd [#allocation4], %s349
          %s351 = smul.addr %s23, 32
          %s352 = scalar_lea.hbm %s2, %s351
          %s354 = sshll.u32 [#allocation5], 4
          %s355 = int_to_ptr.vmem [resolvable:$true] %s354
          %357 = dma.vmem_to_hbm [thread:$0]  %s355, 32, %s352, [#allocation4]
        $region44: #{tpu_custom_call.1} parent=27 // pred_fallthru
          _
        // Predicated region
        $region45: #{tpu_custom_call.1} parent=27 // pred_check
          %p358 = pneg %p119
        $region46: #{tpu_custom_call.1} parent=27 // pred_check_branch
          %360 = sbr.rel (%p358) target = $region48
        $region47: #{tpu_custom_call.1} parent=27 // pred_region
          %361 = dma.done [#allocation4], 32
        $region48: #{tpu_custom_call.1} parent=27 // pred_fallthru
          _
      $region28: #{tpu_custom_call.1} parent=5 // pred_fallthru
        _
      %p362 = scmp.le.s32.totalorder 2, %s12
      // Predicated region
      $region49: #{tpu_custom_call.1} parent=5 // pred_check
        %p363 = pneg %p362
      $region50: #{tpu_custom_call.1} parent=5 // pred_check_branch
        %365 = sbr.rel (%p363) target = $region52
      $region51: #{tpu_custom_call.1} parent=5 // pred_region
        %s366 = ssub.s32 %s12, 2
      $region52: #{tpu_custom_call.1} parent=5 // pred_fallthru
        _
    $region6: #{tpu_custom_call.1} parent=1 // loop_footer
      %s16 = sadd.s32 1, %s12
    $region7: #{tpu_custom_call.1} parent=1 // loop_footer_branch
      %11 = sbr.rel target = $region3
    $region8: #{tpu_custom_call.1} parent=1 // loop_exit
      _
    %367 = vsyncpa [#allocation3], 1
    %s368 = scalar_lea.sflag [#allocation3], 1
    %369 = vsyncpa %s368, 1
    %370 = vsyncpa [#allocation4], 1
    %s371 = scalar_lea.sflag [#allocation4], 1
    %372 = vsyncpa %s371, 1

</llo_original>
